<compile_context>
chip_gen: v6e
topology: v6e:2x2x1
jax: 0.10.0
libtpu: 0.0.40
codegen_flags: <defaults>
</compile_context>

<pallas_src>
import functools

import jax
import jax.numpy as jnp
from jax.experimental import pallas as pl
from jax.experimental.pallas import tpu as pltpu


def linear_kernel(w_ref, b_ref, x_ref, o_ref):
    """y[1, B] = sum_i w[i] * x[i, :] + b   (pure VPU multiply-add, no MXU).

    w_ref: SMEM [IN]      float32 scalars
    b_ref: SMEM [1]       float32 scalar
    x_ref: VMEM [IN, B]   batch on the lane axis
    o_ref: VMEM [1, B]    lane-major store
    """
    in_features = x_ref.shape[0]
    acc = w_ref[0] * x_ref[0:1, :]
    for i in range(1, in_features):        # static trip count (IN=2), unrolled at trace time
        acc = acc + w_ref[i] * x_ref[i:i + 1, :]
    o_ref[...] = (acc + b_ref[0]).astype(o_ref.dtype)


@functools.partial(jax.jit, static_argnames=())
def custom_model_forward(x, weight, bias):
    """Equivalent of nn.Linear(2, 1): y = x @ weight.T + bias.

    x:      [B, IN]   float32
    weight: [OUT, IN] with OUT == 1
    bias:   [OUT]
    returns [B, OUT]
    """
    B, IN = x.shape
    OUT = weight.shape[0]

    x_t = x.T                        # [IN, B] -> batch on the lane axis
    w_flat = weight.reshape(IN)      # [IN]    -> SMEM scalars
    bytes_io = 4 * (x.size + weight.size + bias.size + B * OUT)

    y_t = pl.pallas_call(
        linear_kernel,
        out_shape=jax.ShapeDtypeStruct((OUT, B), x.dtype),
        in_specs=[
            pl.BlockSpec(memory_space=pltpu.MemorySpace.SMEM),   # weight scalars
            pl.BlockSpec(memory_space=pltpu.MemorySpace.SMEM),   # bias scalar
            pl.BlockSpec(memory_space=pltpu.MemorySpace.VMEM),   # x (full block)
        ],
        out_specs=pl.BlockSpec(memory_space=pltpu.MemorySpace.VMEM),
        cost_estimate=pl.CostEstimate(
            flops=2 * B * IN * OUT,
            transcendentals=0,
            bytes_accessed=bytes_io,
        ),
    )(w_flat, bias, x_t)

    return y_t.T                     # [B, OUT], PyTorch layout


if __name__ == "__main__":
    IN_FEATURES, OUT_FEATURES = 2, 1
    BATCH = 8

    key = jax.random.PRNGKey(0)
    kx, kw, kb = jax.random.split(key, 3)

    # Deterministic parameter init mimicking nn.Linear's U(-1/sqrt(in), 1/sqrt(in)).
    bound = 1.0 / (IN_FEATURES ** 0.5)
    weight = jax.random.uniform(
        kw, (OUT_FEATURES, IN_FEATURES), jnp.float32, -bound, bound
    )
    bias = jax.random.uniform(kb, (OUT_FEATURES,), jnp.float32, -bound, bound)

    x = jax.random.normal(kx, (BATCH, IN_FEATURES), jnp.float32)

    y = custom_model_forward(x, weight, bias)
    y = jax.block_until_ready(y)

    # Reference check in plain JAX (same semantics as the PyTorch module).
    y_ref = x @ weight.T + bias
    assert y.shape == (BATCH, OUT_FEATURES), y.shape
    assert jnp.allclose(y, y_ref, atol=1e-5, rtol=1e-5), (y, y_ref)

    print("KERNEL_OK")
</pallas_src>

<mosaic_0001>
module attributes {stable_mosaic.version = 11 : i64} {
  func.func @linear_kernel(%arg0: memref<2xf32, #tpu.memory_space<smem>>, %arg1: memref<1xf32, #tpu.memory_space<smem>>, %arg2: memref<2x8xf32, #tpu.memory_space<vmem>>, %arg3: memref<1x8xf32, #tpu.memory_space<vmem>>) attributes {dimension_semantics = [], scalar_prefetch = 0 : i64, scratch_operands = 0 : i64, tpu.core_type = #tpu.core_type<tc>} {
    %c0 = arith.constant 0 : index
    %0 = memref.load %arg0[%c0] : memref<2xf32, #tpu.memory_space<smem>>
    %c0_0 = arith.constant 0 : index
    %c0_1 = arith.constant 0 : index
    %1 = vector.load %arg2[%c0_0, %c0_1] : memref<2x8xf32, #tpu.memory_space<vmem>>, vector<1x8xf32>
    %2 = vector.broadcast %0 : f32 to vector<1x8xf32>
    %3 = arith.mulf %2, %1 : vector<1x8xf32>
    %c1 = arith.constant 1 : index
    %4 = memref.load %arg0[%c1] : memref<2xf32, #tpu.memory_space<smem>>
    %c1_2 = arith.constant 1 : index
    %c0_3 = arith.constant 0 : index
    %5 = vector.load %arg2[%c1_2, %c0_3] : memref<2x8xf32, #tpu.memory_space<vmem>>, vector<1x8xf32>
    %6 = vector.broadcast %4 : f32 to vector<1x8xf32>
    %7 = arith.mulf %6, %5 : vector<1x8xf32>
    %8 = arith.addf %3, %7 : vector<1x8xf32>
    %c0_4 = arith.constant 0 : index
    %9 = memref.load %arg1[%c0_4] : memref<1xf32, #tpu.memory_space<smem>>
    %10 = vector.broadcast %9 : f32 to vector<1x8xf32>
    %11 = arith.addf %8, %10 : vector<1x8xf32>
    %c0_5 = arith.constant 0 : index
    %c0_6 = arith.constant 0 : index
    %12 = vector.load %arg3[%c0_5, %c0_6] : memref<1x8xf32, #tpu.memory_space<vmem>>, vector<1x8xf32>
    tpu.vector_store %arg3[%c0_5, %c0_6], %11 {strides = array<i32>} : memref<1x8xf32, #tpu.memory_space<vmem>>, vector<1x8xf32>,
    return
  }
}

</mosaic_0001>

<llo_original>
// kernel: custom_model_forward.1
$region0: #{custom_model_forward.1}
  #allocation0 [shape = 'u32[]', space=smem, size = 0x4, offset = 0x4, fixed_abs, tag = 'smem constant byte address 0x4 - core index']
  #allocation1 [shape = 'u32[144,128]{1,0:T(1,128)}', space=vmem, size = 0x12000, scoped, tag = 'internal scratch']
  #allocation2 [shape = 'f32[1]{0:T(128)S(6)}', space=smem, size = 0x200, scoped, tag = 'scoped memory for custom_model_forward.1']
  %s0 = inlined_call_operand.vmem [shape: f32[2], index: 0, kind: input, shape index: {}]
  %s1 = inlined_call_operand.<no memory space> [shape: f32[1], index: 1, kind: input, shape index: {}]
  %s2 = inlined_call_operand.vmem [shape: f32[2,8], index: 2, kind: input, shape index: {}]
  %s3 = inlined_call_operand.hbm [shape: f32[1,8], index: 3, kind: output, shape index: {}]
  %s4 = sld [smem:[#allocation0]]
  $region26: #{custom_model_forward.1} parent=0
    _
  %s6 = ssub.s32 1, %s4
  %s7 = scalar_select 0, %s6, %s4
  %8 = sst [smem:[#allocation2]] %s1
  $region1: #{custom_model_forward.1} parent=0
    #allocation3 [shape = 'u8[512]{0}', space=smem, size = 0x200, scoped, tag = 'input window, operand 0, single buffered']
    #allocation4 [shape = 's32[1]{0}', space=sflag, size = 0x4, scoped, tag = 'scoped memory for custom_model_forward.1']
    #allocation5 [shape = 's32[1]{0}', space=sflag, size = 0x4, scoped, tag = 'scoped memory for custom_model_forward.1']
    #allocation6 [shape = 'u8[512]{0}', space=vmem, size = 0x400, scoped, tag = 'output window, operand 0, single buffered']
    %9 = vsyncpa [#allocation5], 0
    %10 = vsyncpa [#allocation4], 0
    // Predicated region
    $region2: #{custom_model_forward.1} parent=1 // pred_check
      _
    $region3: #{custom_model_forward.1} parent=1 // pred_check_branch
      %12 = sbr.rel (0) target = $region5
    $region4: #{custom_model_forward.1} parent=1 // pred_region
      %s14 = ssub.s32 16, 16
      %15 = vsyncadd [#allocation5], %s14
      %s17 = sshll.u32 %s0, 4
      %s18 = int_to_ptr.vmem [resolvable:$true] %s17
      %20 = dma.vmem_to_smem %s18, 16, [#allocation3], [#allocation5]
    $region5: #{custom_model_forward.1} parent=1 // pred_fallthru
      _
    // Predicated region
    $region6: #{custom_model_forward.1} parent=1 // pred_check
      _
    $region7: #{custom_model_forward.1} parent=1 // pred_check_branch
      %22 = sbr.rel (0) target = $region9
    $region8: #{custom_model_forward.1} parent=1 // pred_region
      _
    $region9: #{custom_model_forward.1} parent=1 // pred_fallthru
      _
    // Predicated region
    $region10: #{custom_model_forward.1} parent=1 // pred_check
      _
    $region11: #{custom_model_forward.1} parent=1 // pred_check_branch
      %24 = sbr.rel (0) target = $region13
    $region12: #{custom_model_forward.1} parent=1 // pred_region
      _
    $region13: #{custom_model_forward.1} parent=1 // pred_fallthru
      _
    // Predicated region
    $region14: #{custom_model_forward.1} parent=1 // pred_check
      _
    $region15: #{custom_model_forward.1} parent=1 // pred_check_branch
      %26 = sbr.rel (0) target = $region17
    $region16: #{custom_model_forward.1} parent=1 // pred_region
      %27 = dma.done [#allocation5], 16
    $region17: #{custom_model_forward.1} parent=1 // pred_fallthru
      _
    %28 = sfence
    %s29 = sld [smem:[#allocation3]]
    %v30 = vld [vmem:[%s2] sm:$0x1]
    %v31 = vstv %s29
    %v32 = vmul.f32 %v31, %v30
    %s33 = sld [smem:[#allocation3 + $0x1]]
    %v34 = vld [vmem:[%s2 + $0x1] sm:$0x1]
    %v35 = vstv %s33
    %v36 = vmul.f32 %v35, %v34
    %v37 = vadd.f32 %v32, %v36
    %s38 = sld [smem:[#allocation2]]
    %v39 = vstv %s38
    %v40 = vadd.f32 %v37, %v39
    %vm41 = vcmask 57344
    %42 = vst.msk [vmem:[#allocation6] sm:$0x1] %vm41, %v40
    // Predicated region
    $region18: #{custom_model_forward.1} parent=1 // pred_check
      _
    $region19: #{custom_model_forward.1} parent=1 // pred_check_branch
      %44 = sbr.rel (0) target = $region21
    $region20: #{custom_model_forward.1} parent=1 // pred_region
      %s46 = ssub.s32 16, 16
      %47 = vsyncadd [#allocation4], %s46
      %s49 = sshll.u32 [#allocation6], 4
      %s50 = int_to_ptr.vmem [resolvable:$true] %s49
      %52 = dma.vmem_to_hbm [thread:$0]  %s50, 16, %s3, [#allocation4]
    $region21: #{custom_model_forward.1} parent=1 // pred_fallthru
      _
    // Predicated region
    $region22: #{custom_model_forward.1} parent=1 // pred_check
      _
    $region23: #{custom_model_forward.1} parent=1 // pred_check_branch
      %54 = sbr.rel (0) target = $region25
    $region24: #{custom_model_forward.1} parent=1 // pred_region
      %55 = dma.done [#allocation4], 16
    $region25: #{custom_model_forward.1} parent=1 // pred_fallthru
      _
    %56 = vsyncpa [#allocation4], 1
    %57 = vsyncpa [#allocation5], 1

</llo_original>
